<compile_context>
chip_gen: v7x
topology: tpu7x:2x2x1
jax: 0.10.0
libtpu: 0.0.40
codegen_flags: <defaults>
</compile_context>

<pallas_src>
import functools
import math

import jax
import jax.numpy as jnp
from jax import lax
from jax.experimental import pallas as pl
from jax.experimental.pallas import tpu as pltpu

_LANE = 128


def _round_up(a, b):
    return (a + b - 1) // b * b


def _embedder_kernel(x_ref, o_ref, *, freqs, include_input, input_dims, lead,
                     inner):
    """x_ref: (d, COL_BLOCK) VMEM tile; o_ref: (rows_pad, COL_BLOCK) VMEM tile.

    Output row layout (rows_pad = lead + 2*d*num_freqs):
      [0 : lead-d]               pad rows (sliced off in the wrapper)
      [lead-d : lead]            x                     (only if include_input)
      [lead+2kd : lead+2(k+1)d]  [sin(f_k x); cos(f_k x)]   (cos = sin(.+pi/2))

    N lives on the lane axis, so every vector op / store is lane-dense.  Each
    frequency is evaluated as ONE sin() over a packed (2d, inner) slab and
    stored as one contiguous sublane slab at a compile-time row offset.
    """
    d = input_dims
    col_block = x_ref.shape[1]
    n_chunks = col_block // inner          # exact by construction in the wrapper
    half_pi = jnp.float32(math.pi / 2.0)

    # Per-row additive phase: 0 for the sin half, pi/2 for the cos half.
    # Hoisted out of both loops (computed once per grid step).
    row = lax.broadcasted_iota(jnp.int32, (2 * d, inner), 0)
    offs = jnp.where(row < d, jnp.float32(0.0), half_pi)

    def body(j, carry):
        c0 = pl.multiple_of(j * inner, _LANE)
        cs = pl.ds(c0, inner)
        xi = x_ref[:, cs]                          # (d, inner), input dtype
        x = xi.astype(jnp.float32)                 # compute in f32
        x2 = jnp.concatenate([x, x], axis=0)       # (2d, inner): fill sublanes
        if include_input:
            if lead == 2 * d:
                # Full aligned tile store; pad rows get a (discarded) copy of x.
                o_ref[0:lead, cs] = x2.astype(o_ref.dtype)
            else:
                o_ref[lead - d:lead, cs] = xi
        # Loop order matches PyTorch: outer over freqs, (sin, cos) packed inside.
        for k, f in enumerate(freqs):
            ang = x2 * jnp.float32(f) + offs       # [f*x ; f*x + pi/2]
            r0 = lead + 2 * k * d
            o_ref[r0:r0 + 2 * d, cs] = jnp.sin(ang).astype(o_ref.dtype)
        return carry

    lax.fori_loop(0, n_chunks, body, 0)


class Embedder:
    """JAX/Pallas port of the PyTorch Embedder module."""

    def __init__(self, *, input_dims, include_input, max_freq_log2, num_freqs,
                 log_sampling=True, periodic_fns=("sin", "cos")):
        # periodic_fns fixed to (sin, cos) — the standard NeRF configuration.
        assert tuple(periodic_fns) == ("sin", "cos")
        self.input_dims = input_dims
        self.include_input = include_input
        if log_sampling:
            freq_bands = 2.0 ** jnp.linspace(0.0, max_freq_log2, num_freqs)
        else:
            freq_bands = jnp.linspace(2.0 ** 0.0, 2.0 ** max_freq_log2, num_freqs)
        # Deterministic "parameters": bake in as compile-time constants.
        self.freqs = tuple(float(f) for f in freq_bands)
        self.out_dim = (input_dims if include_input else 0) \
            + input_dims * 2 * len(self.freqs)

    def __call__(self, inputs, *, col_tile=16 * 1024, inner_tile=1024,
                 vmem_budget_bytes=8 << 20):
        assert col_tile % _LANE == 0 and inner_tile % _LANE == 0
        orig_shape = inputs.shape
        d = orig_shape[-1]
        assert d == self.input_dims
        x2 = inputs.reshape(-1, d)
        n = x2.shape[0]
        if n == 0:
            return jnp.zeros((*orig_shape[:-1], self.out_dim), inputs.dtype)

        n_freqs = len(self.freqs)
        # Front-padded row layout so every frequency slab is sublane-aligned.
        lead = _round_up(d, 8) if self.include_input else 0
        rows_pad = lead + 2 * d * n_freqs
        row_start = (lead - d) if self.include_input else 0

        # Inner (vreg-resident) chunk: multiple of 128 lanes, clamped for tiny n.
        inner = min(inner_tile, _round_up(n, _LANE))

        # Column block: as big as the VMEM budget allows (double-buffered in+out,
        # dtype-aware sublane padding), capped by col_tile and the problem size.
        isize = jnp.dtype(inputs.dtype).itemsize
        sub = max(8, 32 // isize)                      # sublane tile rows (f32:8, bf16:16)
        bytes_per_col = 2 * (_round_up(d, sub) + _round_up(rows_pad, sub)) * isize
        max_cols = max(inner, (vmem_budget_bytes // bytes_per_col) // inner * inner)
        col_block = min(_round_up(col_tile, inner), _round_up(n, inner), max_cols)
        cols = _round_up(n, inner)
        num_steps = pl.cdiv(cols, col_block)
        # v7x megacore: keep >= 2 grid steps whenever both TensorCores have
        # enough work (>= ~2K lanes each), so "parallel" sharding is effective.
        if num_steps == 1 and cols >= max(2 * inner, 4096):
            num_steps = 2
        col_block = _round_up(pl.cdiv(cols, num_steps), inner)
        num_steps = pl.cdiv(cols, col_block)
        n_pad = num_steps * col_block

        # Lane-dense presentation: (D, N); the small column pad fuses with the
        # input transpose (single copy, no separate full-array pad pass).
        # TODO(synk): accept a channels-first (D, N) input directly when the
        # producer can supply it, removing this input-side copy entirely.
        x_t = jnp.pad(x2, ((0, n_pad - n), (0, 0))).T

        kernel = functools.partial(
            _embedder_kernel, freqs=self.freqs, include_input=self.include_input,
            input_dims=d, lead=lead, inner=inner)

        cost = pl.CostEstimate(
            flops=int(2 * n * 2 * d * n_freqs),            # angle mul + phase add
            transcendentals=int(n * 2 * d * n_freqs),      # one sin per output elem
            bytes_accessed=int(n * d * isize + n_pad * rows_pad * isize))

        vmem_need = bytes_per_col * col_block              # double-buffered in+out
        vmem_limit = int(min(max(2 * vmem_need, 16 << 20), 48 << 20))

        out_t = pl.pallas_call(
            kernel,
            out_shape=jax.ShapeDtypeStruct((rows_pad, n_pad), inputs.dtype),
            grid_spec=pltpu.PrefetchScalarGridSpec(
                num_scalar_prefetch=0,
                grid=(num_steps,),
                in_specs=[pl.BlockSpec((d, col_block), lambda i: (0, i))],
                out_specs=pl.BlockSpec((rows_pad, col_block),
                                       lambda i: (0, i)),
            ),
            compiler_params=pltpu.CompilerParams(
                dimension_semantics=("parallel",),     # shards over 2 TCs on v7x
                vmem_limit_bytes=vmem_limit),
            cost_estimate=cost,
        )(x_t)

        # Single fused slice (drop pad rows / pad cols) + transpose restores the
        # PyTorch (N, out_dim) layout.
        out = out_t[row_start:row_start + self.out_dim, :n].T
        return out.reshape(*orig_shape[:-1], self.out_dim)


def _reference(x, freqs, include_input):
    parts = []
    if include_input:
        parts.append(x)
    for f in freqs:
        parts.append(jnp.sin(x * f))
        parts.append(jnp.cos(x * f))
    return jnp.concatenate(parts, axis=-1)


if __name__ == "__main__":
    key = jax.random.PRNGKey(0)
    # Small shapes: batch=2, seq=8, input_dims=4; num_freqs=4 (max_freq_log2=3).
    x = jax.random.normal(key, (2, 8, 4), dtype=jnp.float32)

    embedder = Embedder(
        input_dims=4,
        include_input=True,
        max_freq_log2=3,
        num_freqs=4,
        log_sampling=True,
        periodic_fns=("sin", "cos"),
    )

    out = embedder(x)
    out = jax.block_until_ready(out)

    expected_out_dim = 4 + 4 * 2 * 4  # 36
    assert out.shape == (2, 8, expected_out_dim), out.shape

    ref = _reference(x, embedder.freqs, embedder.include_input)
    assert jnp.allclose(out, ref, atol=1e-5, rtol=1e-5), \
        float(jnp.max(jnp.abs(out - ref)))

    print("KERNEL_OK")
</pallas_src>

<mosaic_0001>
module attributes {stable_mosaic.version = 11 : i64} {
  func.func @_embedder_kernel(%arg0: i32, %arg1: memref<4x128xf32, #tpu.memory_space<vmem>>, %arg2: memref<40x128xf32, #tpu.memory_space<vmem>>) attributes {dimension_semantics = [#tpu.dimension_semantics<parallel>], iteration_bounds = array<i64: 1>, scalar_prefetch = 0 : i64, scratch_operands = 0 : i64, tpu.core_type = #tpu.core_type<tc>, window_params = [{transform_indices = @transform_0, window_bounds = array<i64: 4, 128>}, {transform_indices = @transform_1, window_bounds = array<i64: 40, 128>}]} {
    %0 = tpu.iota {dimensions = array<i32: 0>} : vector<8x128xi32>
    %c4_i32 = arith.constant 4 : i32
    %1 = vector.broadcast %c4_i32 : i32 to vector<8x128xi32>
    %2 = arith.cmpi slt, %0, %1 : vector<8x128xi32>
    %cst = arith.constant 0.000000e+00 : f32
    %cst_0 = arith.constant 1.57079637 : f32
    %3 = vector.broadcast %cst : f32 to vector<8x128xf32>
    %4 = vector.broadcast %cst_0 : f32 to vector<8x128xf32>
    %5 = arith.select %2, %3, %4 : vector<8x128xi1>, vector<8x128xf32>
    %c0_i32 = arith.constant 0 : i32
    %c128_i32 = arith.constant 128 : i32
    %6 = arith.muli %c0_i32, %c128_i32 : i32
    %7 = tpu.assume_multiple %6, 128 : i32
    %c0 = arith.constant 0 : index
    %8 = arith.index_cast %7 : i32 to index
    %9 = vector.load %arg1[%c0, %8] : memref<4x128xf32, #tpu.memory_space<vmem>>, vector<4x128xf32>
    %10 = tpu.concatenate %9, %9 in 0 : vector<4x128xf32>, vector<4x128xf32> -> vector<8x128xf32>
    %c0_1 = arith.constant 0 : index
    %11 = arith.index_cast %7 : i32 to index
    %12 = vector.load %arg2[%c0_1, %11] : memref<40x128xf32, #tpu.memory_space<vmem>>, vector<8x128xf32>
    tpu.vector_store %arg2[%c0_1, %11], %10 {strides = array<i32>} : memref<40x128xf32, #tpu.memory_space<vmem>>, vector<8x128xf32>,
    %cst_2 = arith.constant 1.000000e+00 : f32
    %13 = vector.broadcast %cst_2 : f32 to vector<8x128xf32>
    %14 = arith.mulf %10, %13 : vector<8x128xf32>
    %15 = arith.addf %14, %5 : vector<8x128xf32>
    %16 = math.sin %15 : vector<8x128xf32>
    %c8 = arith.constant 8 : index
    %17 = arith.index_cast %7 : i32 to index
    %18 = vector.load %arg2[%c8, %17] : memref<40x128xf32, #tpu.memory_space<vmem>>, vector<8x128xf32>
    tpu.vector_store %arg2[%c8, %17], %16 {strides = array<i32>} : memref<40x128xf32, #tpu.memory_space<vmem>>, vector<8x128xf32>,
    %cst_3 = arith.constant 2.000000e+00 : f32
    %19 = vector.broadcast %cst_3 : f32 to vector<8x128xf32>
    %20 = arith.mulf %10, %19 : vector<8x128xf32>
    %21 = arith.addf %20, %5 : vector<8x128xf32>
    %22 = math.sin %21 : vector<8x128xf32>
    %c16 = arith.constant 16 : index
    %23 = arith.index_cast %7 : i32 to index
    %24 = vector.load %arg2[%c16, %23] : memref<40x128xf32, #tpu.memory_space<vmem>>, vector<8x128xf32>
    tpu.vector_store %arg2[%c16, %23], %22 {strides = array<i32>} : memref<40x128xf32, #tpu.memory_space<vmem>>, vector<8x128xf32>,
    %cst_4 = arith.constant 4.000000e+00 : f32
    %25 = vector.broadcast %cst_4 : f32 to vector<8x128xf32>
    %26 = arith.mulf %10, %25 : vector<8x128xf32>
    %27 = arith.addf %26, %5 : vector<8x128xf32>
    %28 = math.sin %27 : vector<8x128xf32>
    %c24 = arith.constant 24 : index
    %29 = arith.index_cast %7 : i32 to index
    %30 = vector.load %arg2[%c24, %29] : memref<40x128xf32, #tpu.memory_space<vmem>>, vector<8x128xf32>
    tpu.vector_store %arg2[%c24, %29], %28 {strides = array<i32>} : memref<40x128xf32, #tpu.memory_space<vmem>>, vector<8x128xf32>,
    %cst_5 = arith.constant 8.000000e+00 : f32
    %31 = vector.broadcast %cst_5 : f32 to vector<8x128xf32>
    %32 = arith.mulf %10, %31 : vector<8x128xf32>
    %33 = arith.addf %32, %5 : vector<8x128xf32>
    %34 = math.sin %33 : vector<8x128xf32>
    %c32 = arith.constant 32 : index
    %35 = arith.index_cast %7 : i32 to index
    %36 = vector.load %arg2[%c32, %35] : memref<40x128xf32, #tpu.memory_space<vmem>>, vector<8x128xf32>
    tpu.vector_store %arg2[%c32, %35], %34 {strides = array<i32>} : memref<40x128xf32, #tpu.memory_space<vmem>>, vector<8x128xf32>,
    %c1_i32 = arith.constant 1 : i32
    return
  }
  func.func @transform_0(%arg0: i32) -> (i32, i32) {
    %c0_i32 = arith.constant 0 : i32
    %c0_i32_0 = arith.constant 0 : i32
    return %c0_i32, %arg0 : i32, i32
  }
  func.func @transform_1(%arg0: i32) -> (i32, i32) {
    %c0_i32 = arith.constant 0 : i32
    %c0_i32_0 = arith.constant 0 : i32
    return %c0_i32, %arg0 : i32, i32
  }
}

</mosaic_0001>

<llo_original>
// kernel: tpu_custom_call.1
$region0: #{tpu_custom_call.1}
  #allocation0 [shape = 'u32[]', space=smem, size = 0x4, offset = 0x4, fixed_abs, tag = 'smem constant byte address 0x4 - core index']
  #allocation1 [shape = 'u32[144,128]{1,0:T(1,128)}', space=vmem, size = 0x12000, scoped, tag = 'internal scratch']
  %s0 = inlined_call_operand.hbm [shape: f32[4,128], index: 0, kind: input, shape index: {}]
  %s1 = inlined_call_operand.hbm [shape: f32[40,128], index: 1, kind: output, shape index: {}]
  %s2 = sld [smem:[#allocation0]]
  $region18: #{tpu_custom_call.1} parent=0
    _
  %s4 = ssub.s32 1, %s2
  %s5 = scalar_select 0, %s4, %s2
  $region1: #{tpu_custom_call.1} parent=0
    #allocation2 [shape = 'u8[2048]{0}', space=vmem, size = 0x800, scoped, tag = 'input window, operand 0, single buffered']
    #allocation3 [shape = 's32[1]{0}', space=sflag, size = 0x4, scoped, tag = 'scoped memory for tpu_custom_call.1']
    #allocation4 [shape = 's32[1]{0}', space=sflag, size = 0x4, scoped, tag = 'scoped memory for tpu_custom_call.1']
    #allocation5 [shape = 'u8[20480]{0}', space=vmem, size = 0x5000, scoped, tag = 'output window, operand 0, single buffered']
    %6 = vsyncpa [#allocation3], 0
    %7 = vsyncpa [#allocation4], 0
    // Predicated region
    $region2: #{tpu_custom_call.1} parent=1 // pred_check
      _
    $region3: #{tpu_custom_call.1} parent=1 // pred_check_branch
      %9 = sbr.rel (0) target = $region5
    $region4: #{tpu_custom_call.1} parent=1 // pred_region
      %s11 = ssub.s32 64, 64
      %12 = vsyncadd [#allocation3], %s11
      %s14 = sshll.u32 [#allocation2], 4
      %s15 = int_to_ptr.vmem [resolvable:$true] %s14
      %17 = dma.hbm_to_vmem [thread:$0]  %s0, 64, %s15, [#allocation3]
    $region5: #{tpu_custom_call.1} parent=1 // pred_fallthru
      _
    // Predicated region
    $region6: #{tpu_custom_call.1} parent=1 // pred_check
      _
    $region7: #{tpu_custom_call.1} parent=1 // pred_check_branch
      %19 = sbr.rel (0) target = $region9
    $region8: #{tpu_custom_call.1} parent=1 // pred_region
      %20 = dma.done [#allocation3], 64
    $region9: #{tpu_custom_call.1} parent=1 // pred_fallthru
      _
    %v21 = vlaneseq
    %v22 = vshrl.u32 %v21, 7
    %vm23 = vcmp.lt.s32.totalorder %v22, 4
    %v24 = vsel %vm23, 0.0, 1.5707964
    %v25 = vld [vmem:[#allocation2] sm:$0xf]
    %v27 = vrot.slane %v25, 4
    %vm29 = vcmask 1043456
    %v30 = vsel %vm29, %v25, %v27
    %31 = vst [vmem:[#allocation5] sm:$0xff] %v30
    %v32 = vadd.f32 %v30, %v24
    %v33 = vand.u32 2147483647, %v32
    %vm34 = vcmp.le.f32.partialorder %v33, 0.7853982
    %vm35 = vcmp.lt.s32.totalorder %v32, 0
    %v36 = vand.u32 %v32, 2139095040
    %v37 = vshrl.u32 %v36, 23
    %v38 = vsub.s32 %v37, 127
    %v39 = vand.u32 2147483647, %v32
    %v40 = vand.u32 %v39, 8388607
    %v41 = vor.u32 %v40, 8388608
    %v42 = vsub.s32 0, %v41
    %v43 = vadd.s32 %v38, 1
    %vm44 = vcmp.gt.s32.totalorder %v43, 0
    %v45 = vsel %vm44, %v43, 0
    %v46 = vshrl.u32 %v45, 5
    %v47 = vand.u32 %v45, 31
    %v48 = vsub.s32 32, %v47
    %v49 = vshrl.u32 683565275, %v48
    %v50 = vshll.u32 683565275, %v47
    %v51 = vshrl.u32 2475754826, %v48
    %v52 = vor.u32 %v50, %v51
    %v53 = vshll.u32 2475754826, %v47
    %v54 = vshrl.u32 2131351028, %v48
    %v55 = vor.u32 %v53, %v54
    %v56 = vshll.u32 2131351028, %v47
    %v57 = vshrl.u32 2102212464, %v48
    %v58 = vor.u32 %v56, %v57
    %v59 = vshll.u32 2102212464, %v47
    %v60 = vshrl.u32 920167782, %v48
    %v61 = vor.u32 %v59, %v60
    %v62 = vshll.u32 920167782, %v47
    %v63 = vshrl.u32 1326507024, %v48
    %v64 = vor.u32 %v62, %v63
    %vm65 = vcmp.lt.s32.totalorder %v46, 1
    %vm66 = vcmp.lt.s32.totalorder %v46, 2
    %vm67 = vcmp.lt.s32.totalorder %v46, 3
    %vm68 = vcmp.lt.s32.totalorder %v46, 4
    %v69 = vsel %vm65, %v49, %v52
    %v70 = vsel %vm68, %v58, 2102212464
    %v71 = vsel %vm67, %v55, %v70
    %v72 = vsel %vm66, %v69, %v71
    %v73 = vsel %vm65, %v52, %v55
    %v74 = vsel %vm68, %v61, 920167782
    %v75 = vsel %vm67, %v58, %v74
    %v76 = vsel %vm66, %v73, %v75
    %v77 = vsel %vm65, %v55, %v58
    %v78 = vsel %vm68, %v64, 1326507024
    %v79 = vsel %vm67, %v61, %v78
    %v80 = vsel %vm66, %v77, %v79
    %v81 = vshll.u32 %v41, 8
    %v82 = vmul.u32.u64.compose %v81, %v80
    %v83 = vextract.low.u32 %v82
    %v84 = vextract.high.u32 %v82
    %v85 = vmul.u32.u64.compose %v81, %v76
    %v86 = vextract.low.u32 %v85
    %v87 = vextract.high.u32 %v85
    %v88 = vmul.u32 %v81, %v72
    %v89 = vadd.s32 %v84, %v86
    %vm90 = vc.u32 %v84, %v86
    %v91 = vadd.s32 %v87, 1
    %v92 = vsel %vm90, %v91, %v87
    %v93 = vadd.s32 %v88, %v92
    %v94 = vadd.s32 %v93, 536870912
    %v95 = vshrl.u32 %v94, 30
    %v96 = vshll.u32 %v95, 30
    %v97 = vsub.s32 %v93, %v96
    %vm98 = vcmp.lt.s32.totalorder %v97, 0
    %v99 = vsub.s32 0, %v97
    %v100 = vsel %vm98, %v99, %v97
    %v101 = vclz %v100
    %v102 = vsub.s32 %v101, 2
    %vm103 = vcmp.gt.s32.totalorder 0, %v102
    %v104 = vsel %vm103, 0, %v102
    %v105 = vsub.s32 32, %v104
    %v106 = vshll.u32 %v97, %v104
    %v107 = vshrl.u32 %v89, %v105
    %v108 = vor.u32 %v106, %v107
    %v109 = vsub.s32 4294967266, %v104
    %v110 = vadd.s32 %v109, 127
    %v111 = vshll.u32 %v110, 23
    %v112 = vor.u32 4788187, %v111
    %v113 = vand.u32 2147483647, %v112
    %v115 = vcvt.s32.f32 %v108
    %v116 = vmul.f32 %v115, %v113
    %v117 = vxor.u32 %v116, 2147483648
    %v118 = vsel %vm35, %v117, %v116
    %v119 = vsub.s32 4, %v95
    %v120 = vsel %vm35, %v119, %v95
    %v121 = vsel %vm34, %v32, %v118
    %v122 = vsel %vm34, 0, %v120
    %v123 = vcosq.f32.pop %v121
    %v124 = vsinq.f32.pop %v121
    %vm125 = vweird.f32 %v32
    %v126 = vadd.s32 %v122, 3
    %v127 = vand.u32 %v126, 3
    %vm128 = vcmp.lt.s32.totalorder %v127, 2
    %vm129 = vcmp.eq.s32.totalorder %v127, 0
    %v130 = vxor.u32 %v124, 2147483648
    %v131 = vsel %vm129, %v123, %v130
    %vm132 = vcmp.eq.s32.totalorder %v127, 2
    %v133 = vxor.u32 %v123, 2147483648
    %v134 = vsel %vm132, %v133, %v124
    %v135 = vsel %vm128, %v131, %v134
    %v136 = vsel %vm125, nan, %v135
    %137 = vst [vmem:[#allocation5 + $0x8] sm:$0xff] %v136
    %v138 = vmul.f32 %v30, 2.0
    %v139 = vadd.f32 %v138, %v24
    %v140 = vand.u32 2147483647, %v139
    %vm141 = vcmp.le.f32.partialorder %v140, 0.7853982
    %vm142 = vcmp.lt.s32.totalorder %v139, 0
    %v143 = vand.u32 %v139, 2139095040
    %v144 = vshrl.u32 %v143, 23
    %v145 = vsub.s32 %v144, 127
    %v146 = vand.u32 2147483647, %v139
    %v147 = vand.u32 %v146, 8388607
    %v148 = vor.u32 %v147, 8388608
    %v149 = vsub.s32 0, %v148
    %v150 = vadd.s32 %v145, 1
    %vm151 = vcmp.gt.s32.totalorder %v150, 0
    %v152 = vsel %vm151, %v150, 0
    %v153 = vshrl.u32 %v152, 5
    %v154 = vand.u32 %v152, 31
    %v155 = vsub.s32 32, %v154
    %v156 = vshrl.u32 683565275, %v155
    %v157 = vshll.u32 683565275, %v154
    %v158 = vshrl.u32 2475754826, %v155
    %v159 = vor.u32 %v157, %v158
    %v160 = vshll.u32 2475754826, %v154
    %v161 = vshrl.u32 2131351028, %v155
    %v162 = vor.u32 %v160, %v161
    %v163 = vshll.u32 2131351028, %v154
    %v164 = vshrl.u32 2102212464, %v155
    %v165 = vor.u32 %v163, %v164
    %v166 = vshll.u32 2102212464, %v154
    %v167 = vshrl.u32 920167782, %v155
    %v168 = vor.u32 %v166, %v167
    %v169 = vshll.u32 920167782, %v154
    %v170 = vshrl.u32 1326507024, %v155
    %v171 = vor.u32 %v169, %v170
    %vm172 = vcmp.lt.s32.totalorder %v153, 1
    %vm173 = vcmp.lt.s32.totalorder %v153, 2
    %vm174 = vcmp.lt.s32.totalorder %v153, 3
    %vm175 = vcmp.lt.s32.totalorder %v153, 4
    %v176 = vsel %vm172, %v156, %v159
    %v177 = vsel %vm175, %v165, 2102212464
    %v178 = vsel %vm174, %v162, %v177
    %v179 = vsel %vm173, %v176, %v178
    %v180 = vsel %vm172, %v159, %v162
    %v181 = vsel %vm175, %v168, 920167782
    %v182 = vsel %vm174, %v165, %v181
    %v183 = vsel %vm173, %v180, %v182
    %v184 = vsel %vm172, %v162, %v165
    %v185 = vsel %vm175, %v171, 1326507024
    %v186 = vsel %vm174, %v168, %v185
    %v187 = vsel %vm173, %v184, %v186
    %v188 = vshll.u32 %v148, 8
    %v189 = vmul.u32.u64.compose %v188, %v187
    %v190 = vextract.low.u32 %v189
    %v191 = vextract.high.u32 %v189
    %v192 = vmul.u32.u64.compose %v188, %v183
    %v193 = vextract.low.u32 %v192
    %v194 = vextract.high.u32 %v192
    %v195 = vmul.u32 %v188, %v179
    %v196 = vadd.s32 %v191, %v193
    %vm197 = vc.u32 %v191, %v193
    %v198 = vadd.s32 %v194, 1
    %v199 = vsel %vm197, %v198, %v194
    %v200 = vadd.s32 %v195, %v199
    %v201 = vadd.s32 %v200, 536870912
    %v202 = vshrl.u32 %v201, 30
    %v203 = vshll.u32 %v202, 30
    %v204 = vsub.s32 %v200, %v203
    %vm205 = vcmp.lt.s32.totalorder %v204, 0
    %v206 = vsub.s32 0, %v204
    %v207 = vsel %vm205, %v206, %v204
    %v208 = vclz %v207
    %v209 = vsub.s32 %v208, 2
    %vm210 = vcmp.gt.s32.totalorder 0, %v209
    %v211 = vsel %vm210, 0, %v209
    %v212 = vsub.s32 32, %v211
    %v213 = vshll.u32 %v204, %v211
    %v214 = vshrl.u32 %v196, %v212
    %v215 = vor.u32 %v213, %v214
    %v216 = vsub.s32 4294967266, %v211
    %v217 = vadd.s32 %v216, 127
    %v218 = vshll.u32 %v217, 23
    %v219 = vor.u32 4788187, %v218
    %v220 = vand.u32 2147483647, %v219
    %v222 = vcvt.s32.f32 %v215
    %v223 = vmul.f32 %v222, %v220
    %v224 = vxor.u32 %v223, 2147483648
    %v225 = vsel %vm142, %v224, %v223
    %v226 = vsub.s32 4, %v202
    %v227 = vsel %vm142, %v226, %v202
    %v228 = vsel %vm141, %v139, %v225
    %v229 = vsel %vm141, 0, %v227
    %v230 = vcosq.f32.pop %v228
    %v231 = vsinq.f32.pop %v228
    %vm232 = vweird.f32 %v139
    %v233 = vadd.s32 %v229, 3
    %v234 = vand.u32 %v233, 3
    %vm235 = vcmp.lt.s32.totalorder %v234, 2
    %vm236 = vcmp.eq.s32.totalorder %v234, 0
    %v237 = vxor.u32 %v231, 2147483648
    %v238 = vsel %vm236, %v230, %v237
    %vm239 = vcmp.eq.s32.totalorder %v234, 2
    %v240 = vxor.u32 %v230, 2147483648
    %v241 = vsel %vm239, %v240, %v231
    %v242 = vsel %vm235, %v238, %v241
    %v243 = vsel %vm232, nan, %v242
    %244 = vst [vmem:[#allocation5 + $0x10] sm:$0xff] %v243
    %v245 = vmul.f32 %v30, 4.0
    %v246 = vadd.f32 %v245, %v24
    %v247 = vand.u32 2147483647, %v246
    %vm248 = vcmp.le.f32.partialorder %v247, 0.7853982
    %vm249 = vcmp.lt.s32.totalorder %v246, 0
    %v250 = vand.u32 %v246, 2139095040
    %v251 = vshrl.u32 %v250, 23
    %v252 = vsub.s32 %v251, 127
    %v253 = vand.u32 2147483647, %v246
    %v254 = vand.u32 %v253, 8388607
    %v255 = vor.u32 %v254, 8388608
    %v256 = vsub.s32 0, %v255
    %v257 = vadd.s32 %v252, 1
    %vm258 = vcmp.gt.s32.totalorder %v257, 0
    %v259 = vsel %vm258, %v257, 0
    %v260 = vshrl.u32 %v259, 5
    %v261 = vand.u32 %v259, 31
    %v262 = vsub.s32 32, %v261
    %v263 = vshrl.u32 683565275, %v262
    %v264 = vshll.u32 683565275, %v261
    %v265 = vshrl.u32 2475754826, %v262
    %v266 = vor.u32 %v264, %v265
    %v267 = vshll.u32 2475754826, %v261
    %v268 = vshrl.u32 2131351028, %v262
    %v269 = vor.u32 %v267, %v268
    %v270 = vshll.u32 2131351028, %v261
    %v271 = vshrl.u32 2102212464, %v262
    %v272 = vor.u32 %v270, %v271
    %v273 = vshll.u32 2102212464, %v261
    %v274 = vshrl.u32 920167782, %v262
    %v275 = vor.u32 %v273, %v274
    %v276 = vshll.u32 920167782, %v261
    %v277 = vshrl.u32 1326507024, %v262
    %v278 = vor.u32 %v276, %v277
    %vm279 = vcmp.lt.s32.totalorder %v260, 1
    %vm280 = vcmp.lt.s32.totalorder %v260, 2
    %vm281 = vcmp.lt.s32.totalorder %v260, 3
    %vm282 = vcmp.lt.s32.totalorder %v260, 4
    %v283 = vsel %vm279, %v263, %v266
    %v284 = vsel %vm282, %v272, 2102212464
    %v285 = vsel %vm281, %v269, %v284
    %v286 = vsel %vm280, %v283, %v285
    %v287 = vsel %vm279, %v266, %v269
    %v288 = vsel %vm282, %v275, 920167782
    %v289 = vsel %vm281, %v272, %v288
    %v290 = vsel %vm280, %v287, %v289
    %v291 = vsel %vm279, %v269, %v272
    %v292 = vsel %vm282, %v278, 1326507024
    %v293 = vsel %vm281, %v275, %v292
    %v294 = vsel %vm280, %v291, %v293
    %v295 = vshll.u32 %v255, 8
    %v296 = vmul.u32.u64.compose %v295, %v294
    %v297 = vextract.low.u32 %v296
    %v298 = vextract.high.u32 %v296
    %v299 = vmul.u32.u64.compose %v295, %v290
    %v300 = vextract.low.u32 %v299
    %v301 = vextract.high.u32 %v299
    %v302 = vmul.u32 %v295, %v286
    %v303 = vadd.s32 %v298, %v300
    %vm304 = vc.u32 %v298, %v300
    %v305 = vadd.s32 %v301, 1
    %v306 = vsel %vm304, %v305, %v301
    %v307 = vadd.s32 %v302, %v306
    %v308 = vadd.s32 %v307, 536870912
    %v309 = vshrl.u32 %v308, 30
    %v310 = vshll.u32 %v309, 30
    %v311 = vsub.s32 %v307, %v310
    %vm312 = vcmp.lt.s32.totalorder %v311, 0
    %v313 = vsub.s32 0, %v311
    %v314 = vsel %vm312, %v313, %v311
    %v315 = vclz %v314
    %v316 = vsub.s32 %v315, 2
    %vm317 = vcmp.gt.s32.totalorder 0, %v316
    %v318 = vsel %vm317, 0, %v316
    %v319 = vsub.s32 32, %v318
    %v320 = vshll.u32 %v311, %v318
    %v321 = vshrl.u32 %v303, %v319
    %v322 = vor.u32 %v320, %v321
    %v323 = vsub.s32 4294967266, %v318
    %v324 = vadd.s32 %v323, 127
    %v325 = vshll.u32 %v324, 23
    %v326 = vor.u32 4788187, %v325
    %v327 = vand.u32 2147483647, %v326
    %v329 = vcvt.s32.f32 %v322
    %v330 = vmul.f32 %v329, %v327
    %v331 = vxor.u32 %v330, 2147483648
    %v332 = vsel %vm249, %v331, %v330
    %v333 = vsub.s32 4, %v309
    %v334 = vsel %vm249, %v333, %v309
    %v335 = vsel %vm248, %v246, %v332
    %v336 = vsel %vm248, 0, %v334
    %v337 = vcosq.f32.pop %v335
    %v338 = vsinq.f32.pop %v335
    %vm339 = vweird.f32 %v246
    %v340 = vadd.s32 %v336, 3
    %v341 = vand.u32 %v340, 3
    %vm342 = vcmp.lt.s32.totalorder %v341, 2
    %vm343 = vcmp.eq.s32.totalorder %v341, 0
    %v344 = vxor.u32 %v338, 2147483648
    %v345 = vsel %vm343, %v337, %v344
    %vm346 = vcmp.eq.s32.totalorder %v341, 2
    %v347 = vxor.u32 %v337, 2147483648
    %v348 = vsel %vm346, %v347, %v338
    %v349 = vsel %vm342, %v345, %v348
    %v350 = vsel %vm339, nan, %v349
    %351 = vst [vmem:[#allocation5 + $0x18] sm:$0xff] %v350
    %v352 = vmul.f32 %v30, 8.0
    %v353 = vadd.f32 %v352, %v24
    %v354 = vand.u32 2147483647, %v353
    %vm355 = vcmp.le.f32.partialorder %v354, 0.7853982
    %vm356 = vcmp.lt.s32.totalorder %v353, 0
    %v357 = vand.u32 %v353, 2139095040
    %v358 = vshrl.u32 %v357, 23
    %v359 = vsub.s32 %v358, 127
    %v360 = vand.u32 2147483647, %v353
    %v361 = vand.u32 %v360, 8388607
    %v362 = vor.u32 %v361, 8388608
    %v363 = vsub.s32 0, %v362
    %v364 = vadd.s32 %v359, 1
    %vm365 = vcmp.gt.s32.totalorder %v364, 0
    %v366 = vsel %vm365, %v364, 0
    %v367 = vshrl.u32 %v366, 5
    %v368 = vand.u32 %v366, 31
    %v369 = vsub.s32 32, %v368
    %v370 = vshrl.u32 683565275, %v369
    %v371 = vshll.u32 683565275, %v368
    %v372 = vshrl.u32 2475754826, %v369
    %v373 = vor.u32 %v371, %v372
    %v374 = vshll.u32 2475754826, %v368
    %v375 = vshrl.u32 2131351028, %v369
    %v376 = vor.u32 %v374, %v375
    %v377 = vshll.u32 2131351028, %v368
    %v378 = vshrl.u32 2102212464, %v369
    %v379 = vor.u32 %v377, %v378
    %v380 = vshll.u32 2102212464, %v368
    %v381 = vshrl.u32 920167782, %v369
    %v382 = vor.u32 %v380, %v381
    %v383 = vshll.u32 920167782, %v368
    %v384 = vshrl.u32 1326507024, %v369
    %v385 = vor.u32 %v383, %v384
    %vm386 = vcmp.lt.s32.totalorder %v367, 1
    %vm387 = vcmp.lt.s32.totalorder %v367, 2
    %vm388 = vcmp.lt.s32.totalorder %v367, 3
    %vm389 = vcmp.lt.s32.totalorder %v367, 4
    %v390 = vsel %vm386, %v370, %v373
    %v391 = vsel %vm389, %v379, 2102212464
    %v392 = vsel %vm388, %v376, %v391
    %v393 = vsel %vm387, %v390, %v392
    %v394 = vsel %vm386, %v373, %v376
    %v395 = vsel %vm389, %v382, 920167782
    %v396 = vsel %vm388, %v379, %v395
    %v397 = vsel %vm387, %v394, %v396
    %v398 = vsel %vm386, %v376, %v379
    %v399 = vsel %vm389, %v385, 1326507024
    %v400 = vsel %vm388, %v382, %v399
    %v401 = vsel %vm387, %v398, %v400
    %v402 = vshll.u32 %v362, 8
    %v403 = vmul.u32.u64.compose %v402, %v401
    %v404 = vextract.low.u32 %v403
    %v405 = vextract.high.u32 %v403
    %v406 = vmul.u32.u64.compose %v402, %v397
    %v407 = vextract.low.u32 %v406
    %v408 = vextract.high.u32 %v406
    %v409 = vmul.u32 %v402, %v393
    %v410 = vadd.s32 %v405, %v407
    %vm411 = vc.u32 %v405, %v407
    %v412 = vadd.s32 %v408, 1
    %v413 = vsel %vm411, %v412, %v408
    %v414 = vadd.s32 %v409, %v413
    %v415 = vadd.s32 %v414, 536870912
    %v416 = vshrl.u32 %v415, 30
    %v417 = vshll.u32 %v416, 30
    %v418 = vsub.s32 %v414, %v417
    %vm419 = vcmp.lt.s32.totalorder %v418, 0
    %v420 = vsub.s32 0, %v418
    %v421 = vsel %vm419, %v420, %v418
    %v422 = vclz %v421
    %v423 = vsub.s32 %v422, 2
    %vm424 = vcmp.gt.s32.totalorder 0, %v423
    %v425 = vsel %vm424, 0, %v423
    %v426 = vsub.s32 32, %v425
    %v427 = vshll.u32 %v418, %v425
    %v428 = vshrl.u32 %v410, %v426
    %v429 = vor.u32 %v427, %v428
    %v430 = vsub.s32 4294967266, %v425
    %v431 = vadd.s32 %v430, 127
    %v432 = vshll.u32 %v431, 23
    %v433 = vor.u32 4788187, %v432
    %v434 = vand.u32 2147483647, %v433
    %v436 = vcvt.s32.f32 %v429
    %v437 = vmul.f32 %v436, %v434
    %v438 = vxor.u32 %v437, 2147483648
    %v439 = vsel %vm356, %v438, %v437
    %v440 = vsub.s32 4, %v416
    %v441 = vsel %vm356, %v440, %v416
    %v442 = vsel %vm355, %v353, %v439
    %v443 = vsel %vm355, 0, %v441
    %v444 = vcosq.f32.pop %v442
    %v445 = vsinq.f32.pop %v442
    %vm446 = vweird.f32 %v353
    %v447 = vadd.s32 %v443, 3
    %v448 = vand.u32 %v447, 3
    %vm449 = vcmp.lt.s32.totalorder %v448, 2
    %vm450 = vcmp.eq.s32.totalorder %v448, 0
    %v451 = vxor.u32 %v445, 2147483648
    %v452 = vsel %vm450, %v444, %v451
    %vm453 = vcmp.eq.s32.totalorder %v448, 2
    %v454 = vxor.u32 %v444, 2147483648
    %v455 = vsel %vm453, %v454, %v445
    %v456 = vsel %vm449, %v452, %v455
    %v457 = vsel %vm446, nan, %v456
    %458 = vst [vmem:[#allocation5 + $0x20] sm:$0xff] %v457
    // Predicated region
    $region10: #{tpu_custom_call.1} parent=1 // pred_check
      _
    $region11: #{tpu_custom_call.1} parent=1 // pred_check_branch
      %460 = sbr.rel (0) target = $region13
    $region12: #{tpu_custom_call.1} parent=1 // pred_region
      %s462 = ssub.s32 640, 640
      %463 = vsyncadd [#allocation4], %s462
      %s464 = sshll.u32 [#allocation5], 4
      %s465 = int_to_ptr.vmem [resolvable:$true] %s464
      %470 = dma.vmem_to_hbm [thread:$0]  %s465, 640, %s1, [#allocation4], 128, 128, 8
    $region13: #{tpu_custom_call.1} parent=1 // pred_fallthru
      _
    // Predicated region
    $region14: #{tpu_custom_call.1} parent=1 // pred_check
      _
    $region15: #{tpu_custom_call.1} parent=1 // pred_check_branch
      %472 = sbr.rel (0) target = $region17
    $region16: #{tpu_custom_call.1} parent=1 // pred_region
      %473 = dma.done [#allocation4], 640
    $region17: #{tpu_custom_call.1} parent=1 // pred_fallthru
      _
    %474 = vsyncpa [#allocation3], 1
    %475 = vsyncpa [#allocation4], 1

</llo_original>
